<compile_context>
chip_gen: v6e
topology: v6e:2x2x1
jax: 0.10.0
libtpu: 0.0.40
codegen_flags: <defaults>
</compile_context>

<pallas_src>
import functools

import jax
import jax.numpy as jnp
from jax.experimental import pallas as pl
from jax.experimental.pallas import tpu as pltpu


def _round_up(n, m):
    return ((n + m - 1) // m) * m


def dqn_kernel(x_ref, w1_ref, b1_ref, w2_ref, b2_ref, out_ref, *, matmul_dtype):
    # x: (tile_b, D)  w1: (D, H)  b1: (1, H)  w2: (H, A)  b2: (1, A)
    x = x_ref[...].astype(matmul_dtype)
    w1 = w1_ref[...].astype(matmul_dtype)
    # Hidden layer: (tile_b, D) @ (D, H) -> (tile_b, H), f32 accumulation on MXU.
    h = jnp.dot(x, w1, preferred_element_type=jnp.float32)
    h = jnp.maximum(h + b1_ref[...], 0.0)          # bias + ReLU in f32
    # Output layer: (tile_b, H) @ (H, A) -> (tile_b, A), f32 accumulation.
    w2 = w2_ref[...].astype(matmul_dtype)
    out = jnp.dot(h.astype(matmul_dtype), w2, preferred_element_type=jnp.float32)
    out_ref[...] = (out + b2_ref[...]).astype(out_ref.dtype)


def dqn_forward(x, w1, b1, w2, b2, *, tile_b_max=8192, matmul_dtype=jnp.float32):
    """x: (B, input_dim) f32. w1: (D, H), b1: (1, H), w2: (H, A), b2: (1, A).
    Returns (B, n_actions) f32."""
    B, D = x.shape
    H = w1.shape[1]
    A = w2.shape[1]

    # --- Batch tiling ---------------------------------------------------------
    # Pick the tile count that minimizes padding under the tile-size cap, then
    # round the tile up to a multiple of 128 (sublane/lane friendly).
    tile_b_max = max(128, _round_up(tile_b_max, 128))
    b_pad128 = _round_up(B, 128)
    n_tiles = pl.cdiv(b_pad128, tile_b_max)
    # Megacore (v7x): make sure there are at least 2 grid steps when the padded
    # batch is large enough, so both TensorCores get work. No-op cost on v5e/v6e.
    if n_tiles < 2 and b_pad128 >= 256:
        n_tiles = 2
    tile_b = _round_up(pl.cdiv(B, n_tiles), 128)
    b_pad = n_tiles * tile_b
    grid = (n_tiles,)

    # Row padding only (contiguous, cheap); no transposes in HBM.
    x_p = jnp.pad(x, ((0, b_pad - B), (0, 0))) if b_pad != B else x

    # --- VMEM budget: double-buffered streaming tiles + resident params -------
    param_bytes = (H * D + H + A * H + A) * 4
    stream_bytes = 2 * tile_b * (D + A) * 4          # x / out tiles, double-buffered
    interm_bytes = 3 * tile_b * H * 4                # hidden activations headroom
    need = stream_bytes + interm_bytes + param_bytes
    vmem_limit = int(min(max(2 * need, 8 << 20), 32 << 20))

    flops = 2 * B * (D * H + H * A)
    bytes_accessed = 4 * (b_pad * D + b_pad * A) + param_bytes

    kernel = functools.partial(dqn_kernel, matmul_dtype=matmul_dtype)
    out = pl.pallas_call(
        kernel,
        out_shape=jax.ShapeDtypeStruct((b_pad, A), jnp.float32),
        grid=grid,
        in_specs=[
            pl.BlockSpec((tile_b, D), lambda i: (i, 0)),   # x streams over batch
            pl.BlockSpec((D, H), lambda i: (0, 0)),        # params stay VMEM-resident
            pl.BlockSpec((1, H), lambda i: (0, 0)),
            pl.BlockSpec((H, A), lambda i: (0, 0)),
            pl.BlockSpec((1, A), lambda i: (0, 0)),
        ],
        out_specs=pl.BlockSpec((tile_b, A), lambda i: (i, 0)),
        compiler_params=pltpu.CompilerParams(
            dimension_semantics=("parallel",),             # megacore sharding on v7x
            vmem_limit_bytes=vmem_limit,
        ),
        cost_estimate=pl.CostEstimate(
            flops=flops, transcendentals=0, bytes_accessed=bytes_accessed),
    )(x_p, w1, b1, w2, b2)

    return out[:B, :]                                      # drop batch padding


def init_dqn_params(key, input_dim, n_actions, hidden=64):
    """Deterministic synthetic parameters (PyTorch-style uniform fan-in init)."""
    k1, k2, k3, k4 = jax.random.split(key, 4)
    bound1 = 1.0 / jnp.sqrt(input_dim)
    bound2 = 1.0 / jnp.sqrt(hidden)
    w1 = jax.random.uniform(k1, (input_dim, hidden), jnp.float32, -bound1, bound1)
    b1 = jax.random.uniform(k2, (1, hidden), jnp.float32, -bound1, bound1)
    w2 = jax.random.uniform(k3, (hidden, n_actions), jnp.float32, -bound2, bound2)
    b2 = jax.random.uniform(k4, (1, n_actions), jnp.float32, -bound2, bound2)
    return w1, b1, w2, b2


if __name__ == "__main__":
    input_dim = 16
    n_actions = 4
    batch = 2

    key = jax.random.PRNGKey(0)
    kx, kp = jax.random.split(key)
    x = jax.random.normal(kx, (batch, input_dim), jnp.float32)
    w1, b1, w2, b2 = init_dqn_params(kp, input_dim, n_actions)

    # Pure-JAX f32 reference of the same forward pass.
    ref = jnp.maximum(x @ w1 + b1, 0.0) @ w2 + b2

    # 1) Default (exact f32) path, single tile.
    out_f32 = jax.block_until_ready(dqn_forward(x, w1, b1, w2, b2))
    assert out_f32.shape == (batch, n_actions)
    assert jnp.allclose(out_f32, ref, atol=1e-5, rtol=1e-5)

    # 2) Explicit bf16-matmul path (f32 accumulate): bf16-level tolerance vs f32 ref.
    out_bf16 = jax.block_until_ready(
        dqn_forward(x, w1, b1, w2, b2, matmul_dtype=jnp.bfloat16))
    assert out_bf16.shape == (batch, n_actions)
    assert jnp.allclose(out_bf16, ref, atol=5e-2, rtol=5e-2)

    # 3) Multi-step batch grid + padding path (B not a multiple of the tile).
    batch2 = 300
    x2 = jax.random.normal(jax.random.PRNGKey(1), (batch2, input_dim), jnp.float32)
    ref2 = jnp.maximum(x2 @ w1 + b1, 0.0) @ w2 + b2
    out2 = jax.block_until_ready(
        dqn_forward(x2, w1, b1, w2, b2, tile_b_max=128))
    assert out2.shape == (batch2, n_actions)
    assert jnp.allclose(out2, ref2, atol=1e-5, rtol=1e-5)

    print("KERNEL_OK")
</pallas_src>

<mosaic_0001>
module attributes {stable_mosaic.version = 11 : i64} {
  func.func @dqn_kernel(%arg0: i32, %arg1: memref<128x16xf32, #tpu.memory_space<vmem>>, %arg2: memref<16x64xf32, #tpu.memory_space<vmem>>, %arg3: memref<1x64xf32, #tpu.memory_space<vmem>>, %arg4: memref<64x4xf32, #tpu.memory_space<vmem>>, %arg5: memref<1x4xf32, #tpu.memory_space<vmem>>, %arg6: memref<128x4xf32, #tpu.memory_space<vmem>>) attributes {dimension_semantics = [#tpu.dimension_semantics<parallel>], iteration_bounds = array<i64: 1>, scalar_prefetch = 0 : i64, scratch_operands = 0 : i64, tpu.core_type = #tpu.core_type<tc>, window_params = [{transform_indices = @transform_0, window_bounds = array<i64: 128, 16>}, {pipeline_mode = #tpu.pipeline_mode<synchronous>, transform_indices = @transform_1, window_bounds = array<i64: 16, 64>}, {pipeline_mode = #tpu.pipeline_mode<synchronous>, transform_indices = @transform_2, window_bounds = array<i64: 1, 64>}, {pipeline_mode = #tpu.pipeline_mode<synchronous>, transform_indices = @transform_3, window_bounds = array<i64: 64, 4>}, {pipeline_mode = #tpu.pipeline_mode<synchronous>, transform_indices = @transform_4, window_bounds = array<i64: 1, 4>}, {transform_indices = @transform_5, window_bounds = array<i64: 128, 4>}]} {
    %c0 = arith.constant 0 : index
    %c0_0 = arith.constant 0 : index
    %0 = vector.load %arg1[%c0, %c0_0] : memref<128x16xf32, #tpu.memory_space<vmem>>, vector<128x16xf32>
    %c0_1 = arith.constant 0 : index
    %c0_2 = arith.constant 0 : index
    %1 = vector.load %arg2[%c0_1, %c0_2] : memref<16x64xf32, #tpu.memory_space<vmem>>, vector<16x64xf32>
    %cst = arith.constant dense<0.000000e+00> : vector<128x64xf32>
    %2 = tpu.matmul %0, %1, %cst {dimension_numbers = #tpu.dot_dimension_numbers<[1], [0], [0], [1], [0, 0, 1, 1], [], []>} : vector<128x16xf32>, vector<16x64xf32>, vector<128x64xf32> -> vector<128x64xf32>
    %c0_3 = arith.constant 0 : index
    %c0_4 = arith.constant 0 : index
    %3 = vector.load %arg3[%c0_3, %c0_4] : memref<1x64xf32, #tpu.memory_space<vmem>>, vector<1x64xf32>
    %4 = vector.broadcast %3 : vector<1x64xf32> to vector<128x64xf32>
    %5 = arith.addf %2, %4 : vector<128x64xf32>
    %cst_5 = arith.constant 0.000000e+00 : f32
    %6 = vector.broadcast %cst_5 : f32 to vector<128x64xf32>
    %7 = arith.maximumf %5, %6 : vector<128x64xf32>
    %c0_6 = arith.constant 0 : index
    %c0_7 = arith.constant 0 : index
    %8 = vector.load %arg4[%c0_6, %c0_7] : memref<64x4xf32, #tpu.memory_space<vmem>>, vector<64x4xf32>
    %cst_8 = arith.constant dense<0.000000e+00> : vector<128x4xf32>
    %9 = tpu.matmul %7, %8, %cst_8 {dimension_numbers = #tpu.dot_dimension_numbers<[1], [0], [0], [1], [0, 0, 1, 1], [], []>} : vector<128x64xf32>, vector<64x4xf32>, vector<128x4xf32> -> vector<128x4xf32>
    %c0_9 = arith.constant 0 : index
    %c0_10 = arith.constant 0 : index
    %10 = vector.load %arg5[%c0_9, %c0_10] : memref<1x4xf32, #tpu.memory_space<vmem>>, vector<1x4xf32>
    %11 = vector.broadcast %10 : vector<1x4xf32> to vector<128x4xf32>
    %12 = arith.addf %9, %11 : vector<128x4xf32>
    %c0_11 = arith.constant 0 : index
    %c0_12 = arith.constant 0 : index
    %13 = vector.load %arg6[%c0_11, %c0_12] : memref<128x4xf32, #tpu.memory_space<vmem>>, vector<128x4xf32>
    tpu.vector_store %arg6[%c0_11, %c0_12], %12 {strides = array<i32>} : memref<128x4xf32, #tpu.memory_space<vmem>>, vector<128x4xf32>,
    return
  }
  func.func @transform_0(%arg0: i32) -> (i32, i32) {
    %c0_i32 = arith.constant 0 : i32
    %c0_i32_0 = arith.constant 0 : i32
    return %arg0, %c0_i32 : i32, i32
  }
  func.func @transform_1(%arg0: i32) -> (i32, i32) {
    %c0_i32 = arith.constant 0 : i32
    %c0_i32_0 = arith.constant 0 : i32
    %c0_i32_1 = arith.constant 0 : i32
    return %c0_i32, %c0_i32_0 : i32, i32
  }
  func.func @transform_2(%arg0: i32) -> (i32, i32) {
    %c0_i32 = arith.constant 0 : i32
    %c0_i32_0 = arith.constant 0 : i32
    %c0_i32_1 = arith.constant 0 : i32
    return %c0_i32, %c0_i32_0 : i32, i32
  }
  func.func @transform_3(%arg0: i32) -> (i32, i32) {
    %c0_i32 = arith.constant 0 : i32
    %c0_i32_0 = arith.constant 0 : i32
    %c0_i32_1 = arith.constant 0 : i32
    return %c0_i32, %c0_i32_0 : i32, i32
  }
  func.func @transform_4(%arg0: i32) -> (i32, i32) {
    %c0_i32 = arith.constant 0 : i32
    %c0_i32_0 = arith.constant 0 : i32
    %c0_i32_1 = arith.constant 0 : i32
    return %c0_i32, %c0_i32_0 : i32, i32
  }
  func.func @transform_5(%arg0: i32) -> (i32, i32) {
    %c0_i32 = arith.constant 0 : i32
    %c0_i32_0 = arith.constant 0 : i32
    return %arg0, %c0_i32 : i32, i32
  }
}

</mosaic_0001>

<llo_original>
// kernel: tpu_custom_call.1
$region0: #{tpu_custom_call.1}
  #allocation0 [shape = 'u32[]', space=smem, size = 0x4, offset = 0x4, fixed_abs, tag = 'smem constant byte address 0x4 - core index']
  #allocation1 [shape = 'u32[144,128]{1,0:T(1,128)}', space=vmem, size = 0x12000, scoped, tag = 'internal scratch']
  %s0 = inlined_call_operand.vmem [shape: f32[128,16], index: 0, kind: input, shape index: {}]
  %s1 = inlined_call_operand.vmem [shape: f32[16,64], index: 1, kind: input, shape index: {}]
  %s2 = inlined_call_operand.vmem [shape: f32[1,64], index: 2, kind: input, shape index: {}]
  %s3 = inlined_call_operand.vmem [shape: f32[64,4], index: 3, kind: input, shape index: {}]
  %s4 = inlined_call_operand.vmem [shape: f32[1,4], index: 4, kind: input, shape index: {}]
  %s5 = inlined_call_operand.vmem [shape: f32[128,4], index: 5, kind: output, shape index: {}]
  %s6 = sld [smem:[#allocation0]]
  $region30: #{tpu_custom_call.1} parent=0
    _
  %s8 = ssub.s32 1, %s6
  %s9 = scalar_select 0, %s8, %s6
  // Predicated region
  $region2: #{tpu_custom_call.1} parent=0 // pred_check
    _
  $region3: #{tpu_custom_call.1} parent=0 // pred_check_branch
    %11 = sbr.rel (0) target = $region5
  $region4: #{tpu_custom_call.1} parent=0 // pred_region
    _
  $region5: #{tpu_custom_call.1} parent=0 // pred_fallthru
    _
  // Predicated region
  $region6: #{tpu_custom_call.1} parent=0 // pred_check
    _
  $region7: #{tpu_custom_call.1} parent=0 // pred_check_branch
    %13 = sbr.rel (0) target = $region9
  $region8: #{tpu_custom_call.1} parent=0 // pred_region
    _
  $region9: #{tpu_custom_call.1} parent=0 // pred_fallthru
    _
  // Predicated region
  $region10: #{tpu_custom_call.1} parent=0 // pred_check
    _
  $region11: #{tpu_custom_call.1} parent=0 // pred_check_branch
    %15 = sbr.rel (0) target = $region13
  $region12: #{tpu_custom_call.1} parent=0 // pred_region
    _
  $region13: #{tpu_custom_call.1} parent=0 // pred_fallthru
    _
  // Predicated region
  $region14: #{tpu_custom_call.1} parent=0 // pred_check
    _
  $region15: #{tpu_custom_call.1} parent=0 // pred_check_branch
    %17 = sbr.rel (0) target = $region17
  $region16: #{tpu_custom_call.1} parent=0 // pred_region
    _
  $region17: #{tpu_custom_call.1} parent=0 // pred_fallthru
    _
  // Predicated region
  $region18: #{tpu_custom_call.1} parent=0 // pred_check
    _
  $region19: #{tpu_custom_call.1} parent=0 // pred_check_branch
    %19 = sbr.rel (0) target = $region21
  $region20: #{tpu_custom_call.1} parent=0 // pred_region
    _
  $region21: #{tpu_custom_call.1} parent=0 // pred_fallthru
    _
  %v20 = vld [vmem:[%s0] sm:$0xff]
  %v21 = vld [vmem:[%s0 + $0x8] sm:$0xff]
  %v22 = vld [vmem:[%s0 + $0x10] sm:$0xff]
  %v23 = vld [vmem:[%s0 + $0x18] sm:$0xff]
  %v24 = vld [vmem:[%s0 + $0x20] sm:$0xff]
  %v25 = vld [vmem:[%s0 + $0x28] sm:$0xff]
  %v26 = vld [vmem:[%s0 + $0x30] sm:$0xff]
  %v27 = vld [vmem:[%s0 + $0x38] sm:$0xff]
  %v28 = vld [vmem:[%s0 + $0x40] sm:$0xff]
  %v29 = vld [vmem:[%s0 + $0x48] sm:$0xff]
  %v30 = vld [vmem:[%s0 + $0x50] sm:$0xff]
  %v31 = vld [vmem:[%s0 + $0x58] sm:$0xff]
  %v32 = vld [vmem:[%s0 + $0x60] sm:$0xff]
  %v33 = vld [vmem:[%s0 + $0x68] sm:$0xff]
  %v34 = vld [vmem:[%s0 + $0x70] sm:$0xff]
  %v35 = vld [vmem:[%s0 + $0x78] sm:$0xff]
  %v36 = vld [vmem:[%s1] sm:$0xff]
  %v37 = vld [vmem:[%s1 + $0x8] sm:$0xff]
  %v38 = vld [vmem:[%s2] sm:$0x1]
  %v40 = vlaneseq
  %v41 = vshrl.u32 %v40, 7
  %v42 = vsub.s32 0, %v41
  %v43 = vrot.slane %v38, %v42
  %vm45 = vcmask 130048
  %v47 = vsel %vm45, %v20, 0
  %v50 = vsel %vm45, %v21, 0
  %v53 = vsel %vm45, %v22, 0
  %v56 = vsel %vm45, %v23, 0
  %v59 = vsel %vm45, %v24, 0
  %v62 = vsel %vm45, %v25, 0
  %v65 = vsel %vm45, %v26, 0
  %v68 = vsel %vm45, %v27, 0
  %v71 = vsel %vm45, %v28, 0
  %v74 = vsel %vm45, %v29, 0
  %v77 = vsel %vm45, %v30, 0
  %v80 = vsel %vm45, %v31, 0
  %v83 = vsel %vm45, %v32, 0
  %v86 = vsel %vm45, %v33, 0
  %v89 = vsel %vm45, %v34, 0
  %v92 = vsel %vm45, %v35, 0
  %94 = vmatprep.subr.mxu0 0.0
  %95 = vmatpush1.msra.mxu0 0.0
  %96 = vmatprep.subr.mxu0 0.0
  %97 = vmatpush1.msra.mxu0 0.0
  %98 = vmatprep.subr.mxu0 0.0
  %99 = vmatpush1.msra.mxu0 0.0
  %100 = vmatprep.subr.mxu0 0.0
  %101 = vmatpush1.msra.mxu0 0.0
  %102 = vmatprep.subr.mxu0 0.0
  %103 = vmatpush1.msra.mxu0 0.0
  %104 = vmatprep.subr.mxu0 0.0
  %105 = vmatpush1.msra.mxu0 0.0
  %106 = vmatprep.subr.mxu0 0.0
  %107 = vmatpush1.msra.mxu0 0.0
  %108 = vmatprep.subr.mxu0 0.0
  %109 = vmatpush1.msra.mxu0 0.0
  %110 = vmatprep.subr.mxu0 0.0
  %111 = vmatpush1.msra.mxu0 0.0
  %112 = vmatprep.subr.mxu0 0.0
  %113 = vmatpush1.msra.mxu0 0.0
  %114 = vmatprep.subr.mxu0 0.0
  %115 = vmatpush1.msra.mxu0 0.0
  %116 = vmatprep.subr.mxu0 0.0
  %117 = vmatpush1.msra.mxu0 0.0
  %118 = vmatprep.subr.mxu0 0.0
  %119 = vmatpush1.msra.mxu0 0.0
  %120 = vmatprep.subr.mxu0 0.0
  %121 = vmatpush1.msra.mxu0 0.0
  %122 = vmatprep.subr.mxu0 0.0
  %123 = vmatpush1.msra.mxu0 %v37
  %124 = vmatprep.subr.mxu0 0.0
  %125 = vmatpush1.msra.mxu0 %v36
  %126 = vmatprep.subr.mxu0 0.0
  %127 = vmatpush2.msra.mxu0 0.0
  %128 = vmatprep.subr.mxu0 0.0
  %129 = vmatpush2.msra.mxu0 0.0
  %130 = vmatprep.subr.mxu0 0.0
  %131 = vmatpush2.msra.mxu0 0.0
  %132 = vmatprep.subr.mxu0 0.0
  %133 = vmatpush2.msra.mxu0 0.0
  %134 = vmatprep.subr.mxu0 0.0
  %135 = vmatpush2.msra.mxu0 0.0
  %136 = vmatprep.subr.mxu0 0.0
  %137 = vmatpush2.msra.mxu0 0.0
  %138 = vmatprep.subr.mxu0 0.0
  %139 = vmatpush2.msra.mxu0 0.0
  %140 = vmatprep.subr.mxu0 0.0
  %141 = vmatpush2.msra.mxu0 0.0
  %142 = vmatprep.subr.mxu0 0.0
  %143 = vmatpush2.msra.mxu0 0.0
  %144 = vmatprep.subr.mxu0 0.0
  %145 = vmatpush2.msra.mxu0 0.0
  %146 = vmatprep.subr.mxu0 0.0
  %147 = vmatpush2.msra.mxu0 0.0
  %148 = vmatprep.subr.mxu0 0.0
  %149 = vmatpush2.msra.mxu0 0.0
  %150 = vmatprep.subr.mxu0 0.0
  %151 = vmatpush2.msra.mxu0 0.0
  %152 = vmatprep.subr.mxu0 0.0
  %153 = vmatpush2.msra.mxu0 0.0
  %154 = vmatprep.subr.mxu0 0.0
  %155 = vmatpush2.msra.mxu0 0.0
  %156 = vmatprep.subr.mxu0 0.0
  %157 = vmatpush2.msra.mxu0 0.0
  %158 = vmatprep.mubr.f32.mxu0 0.0
  %159 = vmatmul.mubr.f32.gmra.mxu0 %v47
  %v160 = vpop.f32.mrf.mxu0
  %v161 = vadd.f32 %v43, %v160
  %v162 = vpop.f32.mrf.mxu0
  %163 = vmatprep.mubr.f32.mxu0 0.0
  %164 = vmatmul.mubr.f32.gmra.mxu0 %v50
  %v165 = vpop.f32.mrf.mxu0
  %v166 = vadd.f32 %v43, %v165
  %v167 = vpop.f32.mrf.mxu0
  %168 = vmatprep.mubr.f32.mxu0 0.0
  %169 = vmatmul.mubr.f32.gmra.mxu0 %v53
  %v170 = vpop.f32.mrf.mxu0
  %v171 = vadd.f32 %v43, %v170
  %v172 = vpop.f32.mrf.mxu0
  %173 = vmatprep.mubr.f32.mxu0 0.0
  %174 = vmatmul.mubr.f32.gmra.mxu0 %v56
  %v175 = vpop.f32.mrf.mxu0
  %v176 = vadd.f32 %v43, %v175
  %v177 = vpop.f32.mrf.mxu0
  %178 = vmatprep.mubr.f32.mxu0 0.0
  %179 = vmatmul.mubr.f32.gmra.mxu0 %v59
  %v180 = vpop.f32.mrf.mxu0
  %v181 = vadd.f32 %v43, %v180
  %v182 = vpop.f32.mrf.mxu0
  %183 = vmatprep.mubr.f32.mxu0 0.0
  %184 = vmatmul.mubr.f32.gmra.mxu0 %v62
  %v185 = vpop.f32.mrf.mxu0
  %v186 = vadd.f32 %v43, %v185
  %v187 = vpop.f32.mrf.mxu0
  %188 = vmatprep.mubr.f32.mxu0 0.0
  %189 = vmatmul.mubr.f32.gmra.mxu0 %v65
  %v190 = vpop.f32.mrf.mxu0
  %v191 = vadd.f32 %v43, %v190
  %v192 = vpop.f32.mrf.mxu0
  %193 = vmatprep.mubr.f32.mxu0 0.0
  %194 = vmatmul.mubr.f32.gmra.mxu0 %v68
  %v195 = vpop.f32.mrf.mxu0
  %v196 = vadd.f32 %v43, %v195
  %v197 = vpop.f32.mrf.mxu0
  %198 = vmatprep.mubr.f32.mxu0 0.0
  %199 = vmatmul.mubr.f32.gmra.mxu0 %v71
  %v200 = vpop.f32.mrf.mxu0
  %v201 = vadd.f32 %v43, %v200
  %v202 = vpop.f32.mrf.mxu0
  %203 = vmatprep.mubr.f32.mxu0 0.0
  %204 = vmatmul.mubr.f32.gmra.mxu0 %v74
  %v205 = vpop.f32.mrf.mxu0
  %v206 = vadd.f32 %v43, %v205
  %v207 = vpop.f32.mrf.mxu0
  %208 = vmatprep.mubr.f32.mxu0 0.0
  %209 = vmatmul.mubr.f32.gmra.mxu0 %v77
  %v210 = vpop.f32.mrf.mxu0
  %v211 = vadd.f32 %v43, %v210
  %v212 = vpop.f32.mrf.mxu0
  %213 = vmatprep.mubr.f32.mxu0 0.0
  %214 = vmatmul.mubr.f32.gmra.mxu0 %v80
  %v215 = vpop.f32.mrf.mxu0
  %v216 = vadd.f32 %v43, %v215
  %v217 = vpop.f32.mrf.mxu0
  %218 = vmatprep.mubr.f32.mxu0 0.0
  %219 = vmatmul.mubr.f32.gmra.mxu0 %v83
  %v220 = vpop.f32.mrf.mxu0
  %v221 = vadd.f32 %v43, %v220
  %v222 = vpop.f32.mrf.mxu0
  %223 = vmatprep.mubr.f32.mxu0 0.0
  %224 = vmatmul.mubr.f32.gmra.mxu0 %v86
  %v225 = vpop.f32.mrf.mxu0
  %v226 = vadd.f32 %v43, %v225
  %v227 = vpop.f32.mrf.mxu0
  %228 = vmatprep.mubr.f32.mxu0 0.0
  %229 = vmatmul.mubr.f32.gmra.mxu0 %v89
  %v230 = vpop.f32.mrf.mxu0
  %v231 = vadd.f32 %v43, %v230
  %v232 = vpop.f32.mrf.mxu0
  %233 = vmatprep.mubr.f32.mxu0 0.0
  %234 = vmatmul.mubr.f32.gmra.mxu0 %v92
  %v235 = vpop.f32.mrf.mxu0
  %v236 = vadd.f32 %v43, %v235
  %v237 = vpop.f32.mrf.mxu0
  %238 = vdwg.mxu0
  %v239 = vmax.f32 %v161, 0.0
  %v240 = vmax.f32 %v166, 0.0
  %v241 = vmax.f32 %v171, 0.0
  %v242 = vmax.f32 %v176, 0.0
  %v243 = vmax.f32 %v181, 0.0
  %v244 = vmax.f32 %v186, 0.0
  %v245 = vmax.f32 %v191, 0.0
  %v246 = vmax.f32 %v196, 0.0
  %v247 = vmax.f32 %v201, 0.0
  %v248 = vmax.f32 %v206, 0.0
  %v249 = vmax.f32 %v211, 0.0
  %v250 = vmax.f32 %v216, 0.0
  %v251 = vmax.f32 %v221, 0.0
  %v252 = vmax.f32 %v226, 0.0
  %v253 = vmax.f32 %v231, 0.0
  %v254 = vmax.f32 %v236, 0.0
  %v255 = vld [vmem:[%s3] sm:$0xff]
  %v256 = vld [vmem:[%s3 + $0x8] sm:$0xff]
  %v257 = vld [vmem:[%s3 + $0x10] sm:$0xff]
  %v258 = vld [vmem:[%s3 + $0x18] sm:$0xff]
  %v259 = vld [vmem:[%s3 + $0x20] sm:$0xff]
  %v260 = vld [vmem:[%s3 + $0x28] sm:$0xff]
  %v261 = vld [vmem:[%s3 + $0x30] sm:$0xff]
  %v262 = vld [vmem:[%s3 + $0x38] sm:$0xff]
  %v263 = vld [vmem:[%s4] sm:$0x1]
  %v265 = vlaneseq
  %v266 = vshrl.u32 %v265, 7
  %v267 = vsub.s32 0, %v266
  %v268 = vrot.slane %v263, %v267
  %vm270 = vcmask 523264
  %v272 = vsel %vm270, %v239, 0
  %v275 = vsel %vm270, %v240, 0
  %v278 = vsel %vm270, %v241, 0
  %v281 = vsel %vm270, %v242, 0
  %v284 = vsel %vm270, %v243, 0
  %v287 = vsel %vm270, %v244, 0
  %v290 = vsel %vm270, %v245, 0
  %v293 = vsel %vm270, %v246, 0
  %v296 = vsel %vm270, %v247, 0
  %v299 = vsel %vm270, %v248, 0
  %v302 = vsel %vm270, %v249, 0
  %v305 = vsel %vm270, %v250, 0
  %v308 = vsel %vm270, %v251, 0
  %v311 = vsel %vm270, %v252, 0
  %v314 = vsel %vm270, %v253, 0
  %v317 = vsel %vm270, %v254, 0
  %319 = vmatprep.subr.mxu0 0.0
  %320 = vmatpush1.msra.mxu0 0.0
  %321 = vmatprep.subr.mxu0 0.0
  %322 = vmatpush1.msra.mxu0 0.0
  %323 = vmatprep.subr.mxu0 0.0
  %324 = vmatpush1.msra.mxu0 0.0
  %325 = vmatprep.subr.mxu0 0.0
  %326 = vmatpush1.msra.mxu0 0.0
  %327 = vmatprep.subr.mxu0 0.0
  %328 = vmatpush1.msra.mxu0 0.0
  %329 = vmatprep.subr.mxu0 0.0
  %330 = vmatpush1.msra.mxu0 0.0
  %331 = vmatprep.subr.mxu0 0.0
  %332 = vmatpush1.msra.mxu0 0.0
  %333 = vmatprep.subr.mxu0 0.0
  %334 = vmatpush1.msra.mxu0 0.0
  %335 = vmatprep.subr.mxu0 0.0
  %336 = vmatpush1.msra.mxu0 %v262
  %337 = vmatprep.subr.mxu0 0.0
  %338 = vmatpush1.msra.mxu0 %v261
  %339 = vmatprep.subr.mxu0 0.0
  %340 = vmatpush1.msra.mxu0 %v260
  %341 = vmatprep.subr.mxu0 0.0
  %342 = vmatpush1.msra.mxu0 %v259
  %343 = vmatprep.subr.mxu0 0.0
  %344 = vmatpush1.msra.mxu0 %v258
  %345 = vmatprep.subr.mxu0 0.0
  %346 = vmatpush1.msra.mxu0 %v257
  %347 = vmatprep.subr.mxu0 0.0
  %348 = vmatpush1.msra.mxu0 %v256
  %349 = vmatprep.subr.mxu0 0.0
  %350 = vmatpush1.msra.mxu0 %v255
  %351 = vmatprep.subr.mxu0 0.0
  %352 = vmatpush2.msra.mxu0 0.0
  %353 = vmatprep.subr.mxu0 0.0
  %354 = vmatpush2.msra.mxu0 0.0
  %355 = vmatprep.subr.mxu0 0.0
  %356 = vmatpush2.msra.mxu0 0.0
  %357 = vmatprep.subr.mxu0 0.0
  %358 = vmatpush2.msra.mxu0 0.0
  %359 = vmatprep.subr.mxu0 0.0
  %360 = vmatpush2.msra.mxu0 0.0
  %361 = vmatprep.subr.mxu0 0.0
  %362 = vmatpush2.msra.mxu0 0.0
  %363 = vmatprep.subr.mxu0 0.0
  %364 = vmatpush2.msra.mxu0 0.0
  %365 = vmatprep.subr.mxu0 0.0
  %366 = vmatpush2.msra.mxu0 0.0
  %367 = vmatprep.subr.mxu0 0.0
  %368 = vmatpush2.msra.mxu0 0.0
  %369 = vmatprep.subr.mxu0 0.0
  %370 = vmatpush2.msra.mxu0 0.0
  %371 = vmatprep.subr.mxu0 0.0
  %372 = vmatpush2.msra.mxu0 0.0
  %373 = vmatprep.subr.mxu0 0.0
  %374 = vmatpush2.msra.mxu0 0.0
  %375 = vmatprep.subr.mxu0 0.0
  %376 = vmatpush2.msra.mxu0 0.0
  %377 = vmatprep.subr.mxu0 0.0
  %378 = vmatpush2.msra.mxu0 0.0
  %379 = vmatprep.subr.mxu0 0.0
  %380 = vmatpush2.msra.mxu0 0.0
  %381 = vmatprep.subr.mxu0 0.0
  %382 = vmatpush2.msra.mxu0 0.0
  %383 = vmatprep.mubr.f32.mxu0 0.0
  %384 = vmatmul.mubr.f32.gmra.mxu0 %v272
  %v385 = vpop.f32.mrf.mxu0
  %v386 = vadd.f32 %v268, %v385
  %v387 = vpop.f32.mrf.mxu0
  %388 = vmatprep.mubr.f32.mxu0 0.0
  %389 = vmatmul.mubr.f32.gmra.mxu0 %v275
  %v390 = vpop.f32.mrf.mxu0
  %v391 = vadd.f32 %v268, %v390
  %v392 = vpop.f32.mrf.mxu0
  %393 = vmatprep.mubr.f32.mxu0 0.0
  %394 = vmatmul.mubr.f32.gmra.mxu0 %v278
  %v395 = vpop.f32.mrf.mxu0
  %v396 = vadd.f32 %v268, %v395
  %v397 = vpop.f32.mrf.mxu0
  %398 = vmatprep.mubr.f32.mxu0 0.0
  %399 = vmatmul.mubr.f32.gmra.mxu0 %v281
  %v400 = vpop.f32.mrf.mxu0
  %v401 = vadd.f32 %v268, %v400
  %v402 = vpop.f32.mrf.mxu0
  %403 = vmatprep.mubr.f32.mxu0 0.0
  %404 = vmatmul.mubr.f32.gmra.mxu0 %v284
  %v405 = vpop.f32.mrf.mxu0
  %v406 = vadd.f32 %v268, %v405
  %v407 = vpop.f32.mrf.mxu0
  %408 = vmatprep.mubr.f32.mxu0 0.0
  %409 = vmatmul.mubr.f32.gmra.mxu0 %v287
  %v410 = vpop.f32.mrf.mxu0
  %v411 = vadd.f32 %v268, %v410
  %v412 = vpop.f32.mrf.mxu0
  %413 = vmatprep.mubr.f32.mxu0 0.0
  %414 = vmatmul.mubr.f32.gmra.mxu0 %v290
  %v415 = vpop.f32.mrf.mxu0
  %v416 = vadd.f32 %v268, %v415
  %v417 = vpop.f32.mrf.mxu0
  %418 = vmatprep.mubr.f32.mxu0 0.0
  %419 = vmatmul.mubr.f32.gmra.mxu0 %v293
  %v420 = vpop.f32.mrf.mxu0
  %v421 = vadd.f32 %v268, %v420
  %v422 = vpop.f32.mrf.mxu0
  %423 = vmatprep.mubr.f32.mxu0 0.0
  %424 = vmatmul.mubr.f32.gmra.mxu0 %v296
  %v425 = vpop.f32.mrf.mxu0
  %v426 = vadd.f32 %v268, %v425
  %v427 = vpop.f32.mrf.mxu0
  %428 = vmatprep.mubr.f32.mxu0 0.0
  %429 = vmatmul.mubr.f32.gmra.mxu0 %v299
  %v430 = vpop.f32.mrf.mxu0
  %v431 = vadd.f32 %v268, %v430
  %v432 = vpop.f32.mrf.mxu0
  %433 = vmatprep.mubr.f32.mxu0 0.0
  %434 = vmatmul.mubr.f32.gmra.mxu0 %v302
  %v435 = vpop.f32.mrf.mxu0
  %v436 = vadd.f32 %v268, %v435
  %v437 = vpop.f32.mrf.mxu0
  %438 = vmatprep.mubr.f32.mxu0 0.0
  %439 = vmatmul.mubr.f32.gmra.mxu0 %v305
  %v440 = vpop.f32.mrf.mxu0
  %v441 = vadd.f32 %v268, %v440
  %v442 = vpop.f32.mrf.mxu0
  %443 = vmatprep.mubr.f32.mxu0 0.0
  %444 = vmatmul.mubr.f32.gmra.mxu0 %v308
  %v445 = vpop.f32.mrf.mxu0
  %v446 = vadd.f32 %v268, %v445
  %v447 = vpop.f32.mrf.mxu0
  %448 = vmatprep.mubr.f32.mxu0 0.0
  %449 = vmatmul.mubr.f32.gmra.mxu0 %v311
  %v450 = vpop.f32.mrf.mxu0
  %v451 = vadd.f32 %v268, %v450
  %v452 = vpop.f32.mrf.mxu0
  %453 = vmatprep.mubr.f32.mxu0 0.0
  %454 = vmatmul.mubr.f32.gmra.mxu0 %v314
  %v455 = vpop.f32.mrf.mxu0
  %v456 = vadd.f32 %v268, %v455
  %v457 = vpop.f32.mrf.mxu0
  %458 = vmatprep.mubr.f32.mxu0 0.0
  %459 = vmatmul.mubr.f32.gmra.mxu0 %v317
  %v460 = vpop.f32.mrf.mxu0
  %v461 = vadd.f32 %v268, %v460
  %v462 = vpop.f32.mrf.mxu0
  %463 = vdwg.mxu0
  %vm464 = vcmask 31744
  %465 = vst.msk [vmem:[%s5] sm:$0xff] %vm464, %v386
  %466 = vst.msk [vmem:[%s5 + $0x8] sm:$0xff] %vm464, %v391
  %467 = vst.msk [vmem:[%s5 + $0x10] sm:$0xff] %vm464, %v396
  %468 = vst.msk [vmem:[%s5 + $0x18] sm:$0xff] %vm464, %v401
  %469 = vst.msk [vmem:[%s5 + $0x20] sm:$0xff] %vm464, %v406
  %470 = vst.msk [vmem:[%s5 + $0x28] sm:$0xff] %vm464, %v411
  %471 = vst.msk [vmem:[%s5 + $0x30] sm:$0xff] %vm464, %v416
  %472 = vst.msk [vmem:[%s5 + $0x38] sm:$0xff] %vm464, %v421
  %473 = vst.msk [vmem:[%s5 + $0x40] sm:$0xff] %vm464, %v426
  %474 = vst.msk [vmem:[%s5 + $0x48] sm:$0xff] %vm464, %v431
  %475 = vst.msk [vmem:[%s5 + $0x50] sm:$0xff] %vm464, %v436
  %476 = vst.msk [vmem:[%s5 + $0x58] sm:$0xff] %vm464, %v441
  %477 = vst.msk [vmem:[%s5 + $0x60] sm:$0xff] %vm464, %v446
  %478 = vst.msk [vmem:[%s5 + $0x68] sm:$0xff] %vm464, %v451
  %479 = vst.msk [vmem:[%s5 + $0x70] sm:$0xff] %vm464, %v456
  %480 = vst.msk [vmem:[%s5 + $0x78] sm:$0xff] %vm464, %v461
  // Predicated region
  $region22: #{tpu_custom_call.1} parent=0 // pred_check
    _
  $region23: #{tpu_custom_call.1} parent=0 // pred_check_branch
    %482 = sbr.rel (0) target = $region25
  $region24: #{tpu_custom_call.1} parent=0 // pred_region
    _
  $region25: #{tpu_custom_call.1} parent=0 // pred_fallthru
    _
  // Predicated region
  $region26: #{tpu_custom_call.1} parent=0 // pred_check
    _
  $region27: #{tpu_custom_call.1} parent=0 // pred_check_branch
    %484 = sbr.rel (0) target = $region29
  $region28: #{tpu_custom_call.1} parent=0 // pred_region
    _
  $region29: #{tpu_custom_call.1} parent=0 // pred_fallthru
    _

</llo_original>
